<compile_context>
chip_gen: v6e
topology: v6e:2x2x1
jax: 0.10.0
libtpu: 0.0.40
codegen_flags: <defaults>
</compile_context>

<pallas_src>
import functools

import jax
import jax.numpy as jnp
from jax.experimental import pallas as pl
from jax.experimental.pallas import tpu as pltpu

_LANE = 128
_ROW_ALIGN = 32                     # sublane-row multiple valid for f32/bf16/int8 blocks
_MAX_TILE_ROWS = 512                # 512 * 128 = 65536 pixels per grid step
_X_BLOCK_BUDGET = 3 * 1024 * 1024   # per-buffer byte budget for the x tile (f32 working set)


def _round_up(v, m):
    return ((v + m - 1) // m) * m


def _valid_f32(mask_ref, label_ref):
    lab = mask_ref[0].astype(jnp.int32)                       # (S, 128), widened from uint8
    return ((lab != label_ref[0]) & (lab != 255)).astype(jnp.float32)


def _write_partials(esum_ref, msum_ref, b, vf):
    # Per-tile partial sums folded down to a single (8, 128) vreg (vreg-wise VPU adds:
    # the (S//8, 8, 128) reshape is layout-neutral).
    srows = b.shape[0]                                        # multiple of 8
    esum_ref[0, 0] = jnp.sum((b * vf).reshape(srows // 8, 8, _LANE), axis=0)
    msum_ref[0, 0] = jnp.sum(vf.reshape(srows // 8, 8, _LANE), axis=0)


def _entropy_max_kernel(label_ref, x_ref, mask_ref, esum_ref, msum_ref):
    x = x_ref[0].astype(jnp.float32)                          # (C, S, 128)
    z = x - jnp.max(x, axis=0, keepdims=True)                 # leading-axis max (VPU)
    e = jnp.exp(z)
    s = jnp.sum(e, axis=0)                                    # (S, 128)
    sez = jnp.sum(e * z, axis=0)                              # (S, 128)
    ent = jnp.log(s) - sez / s                                # fused: -sum p*logp
    _write_partials(esum_ref, msum_ref, ent, _valid_f32(mask_ref, label_ref))


def _entropy_top2_kernel(label_ref, x_ref, mask_ref, esum_ref, msum_ref):
    x = x_ref[0].astype(jnp.float32)                          # (C, S, 128)
    m1 = jnp.max(x, axis=0)                                   # largest logit
    is_max = x == m1[None]
    cnt = jnp.sum(is_max.astype(jnp.float32), axis=0)
    m2 = jnp.max(jnp.where(is_max, -jnp.inf, x), axis=0)      # second-largest logit
    m2 = jnp.where(cnt > 1.0, m1, m2)                         # topk duplicates exact ties
    e = jnp.exp(x - m1[None])                                 # unnormalized softmax
    s = jnp.sum(e, axis=0)
    inv_s = 1.0 / s                                           # one divide per pixel
    p1 = inv_s                                                # exp(0) * inv_s
    p2 = jnp.exp(m2 - m1) * inv_s
    b = 0.5 * (jnp.abs(p1 - 0.5) + jnp.abs(p2 - 0.5))
    _write_partials(esum_ref, msum_ref, b, _valid_f32(mask_ref, label_ref))


@functools.partial(jax.jit, static_argnames=("loss_type",))
def entropy_loss(x, mask, mask_label, loss_type="max"):
    """x: (N, C, H, W) float (f32 or bf16), mask: (N, H, W) int, mask_label: scalar int."""
    N, C, H, W = x.shape
    HW = H * W

    rows = pl.cdiv(HW, _LANE)
    rows_al = _round_up(rows, _ROW_ALIGN)
    # Tile rows: bounded by a VMEM budget on the f32 working set, then split rows_al
    # into equal-ish tiles so padding never exceeds one alignment quantum per tile.
    rows_by_vmem = max(
        _ROW_ALIGN,
        (_X_BLOCK_BUDGET // (C * _LANE * 4)) // _ROW_ALIGN * _ROW_ALIGN,
    )
    limit = min(_MAX_TILE_ROWS, rows_by_vmem)
    num_tiles = pl.cdiv(rows_al, limit)
    tile_rows = _round_up(pl.cdiv(rows_al, num_tiles), _ROW_ALIGN)
    rows_pad = num_tiles * tile_rows
    hw_pad = rows_pad * _LANE

    xr = x.reshape(N, C, HW)
    mr = mask.reshape(N, HW)
    if hw_pad != HW:
        xr = jnp.pad(xr, ((0, 0), (0, 0), (0, hw_pad - HW)))
        mr = jnp.pad(mr, ((0, 0), (0, hw_pad - HW)), constant_values=255)  # pad pixels invalid
    xr = xr.reshape(N, C, rows_pad, _LANE)                    # keep caller dtype (bf16 ok)
    # TODO(synk): uint8 mask assumes label values fit in [0, 255] (standard segmentation).
    mr = mr.astype(jnp.uint8).reshape(N, rows_pad, _LANE)
    label = jnp.asarray(mask_label, jnp.int32).reshape(1)

    kernel = _entropy_max_kernel if loss_type == "max" else _entropy_top2_kernel

    esum, msum = pl.pallas_call(
        kernel,
        out_shape=(
            jax.ShapeDtypeStruct((N, num_tiles, 8, _LANE), jnp.float32),
            jax.ShapeDtypeStruct((N, num_tiles, 8, _LANE), jnp.float32),
        ),
        grid_spec=pltpu.PrefetchScalarGridSpec(
            num_scalar_prefetch=1,
            grid=(N, num_tiles),
            in_specs=[
                pl.BlockSpec((1, C, tile_rows, _LANE), lambda n, t, lab: (n, 0, t, 0)),
                pl.BlockSpec((1, tile_rows, _LANE), lambda n, t, lab: (n, t, 0)),
            ],
            out_specs=[
                pl.BlockSpec((1, 1, 8, _LANE), lambda n, t, lab: (n, t, 0, 0)),
                pl.BlockSpec((1, 1, 8, _LANE), lambda n, t, lab: (n, t, 0, 0)),
            ],
        ),
        compiler_params=pltpu.CompilerParams(
            dimension_semantics=("parallel", "parallel"),
            vmem_limit_bytes=32 * 1024 * 1024,
        ),
    )(label, xr, mr)

    return jnp.sum(esum) / jnp.sum(msum)


def _entropy_loss_ref(x, mask, mask_label, loss_type="max"):
    # Pure-JAX reference mirroring the PyTorch forward.
    valid = ((mask != mask_label) & (mask != 255)).astype(jnp.float32)
    if loss_type == "max":
        p = jax.nn.softmax(x, axis=1)
        logp = jax.nn.log_softmax(x, axis=1)
        b = -jnp.sum(p * logp, axis=1)
    else:
        p = jax.nn.softmax(x, axis=1)
        top2 = jax.lax.top_k(jnp.moveaxis(p, 1, -1), 2)[0]
        b = jnp.mean(jnp.abs(top2 - 0.5), axis=-1)
    return jnp.sum(b * valid) / jnp.sum(valid)


if __name__ == "__main__":
    key = jax.random.PRNGKey(0)

    # Case 1: lane-aligned spatial size.
    k1, k2, k3, k4 = jax.random.split(key, 4)
    cases = []
    N, C, H, W = 2, 4, 16, 16
    x1 = jax.random.normal(k1, (N, C, H, W), dtype=jnp.float32)
    m1 = jax.random.randint(k2, (N, H, W), 0, 5, dtype=jnp.int32)
    m1 = m1.at[:, 0, :].set(255)                               # row of "ignore" pixels
    cases.append((x1, m1, 1))

    # Case 2: ragged spatial size + odd channel count (exercises padding path).
    N, C, H, W = 2, 5, 17, 19
    x2 = jax.random.normal(k3, (N, C, H, W), dtype=jnp.float32)
    m2 = jax.random.randint(k4, (N, H, W), 0, 6, dtype=jnp.int32)
    m2 = m2.at[:, :, 0].set(255)
    cases.append((x2, m2, 2))

    for x, mask, mask_label in cases:
        for lt in ("max", "top2"):
            loss = entropy_loss(x, mask, mask_label, loss_type=lt)
            jax.block_until_ready(loss)
            ref = _entropy_loss_ref(x, mask, mask_label, loss_type=lt)
            assert jnp.allclose(loss, ref, rtol=1e-5, atol=1e-5), (lt, loss, ref)

    print("KERNEL_OK")
</pallas_src>

<mosaic_0001>
module attributes {stable_mosaic.version = 11 : i64} {
  func.func @_entropy_max_kernel(%arg0: i32, %arg1: i32, %arg2: memref<1xi32, #tpu.memory_space<smem>>, %arg3: memref<1x4x32x128xf32, #tpu.memory_space<vmem>>, %arg4: memref<1x32x128xi8, #tpu.memory_space<vmem>>, %arg5: memref<1x1x8x128xf32, #tpu.memory_space<vmem>>, %arg6: memref<1x1x8x128xf32, #tpu.memory_space<vmem>>) attributes {dimension_semantics = [#tpu.dimension_semantics<parallel>, #tpu.dimension_semantics<parallel>], iteration_bounds = array<i64: 2, 1>, scalar_prefetch = 1 : i64, scratch_operands = 0 : i64, tpu.core_type = #tpu.core_type<tc>, window_params = [{transform_indices = @transform_0, window_bounds = array<i64: 1, 4, 32, 128>}, {transform_indices = @transform_1, window_bounds = array<i64: 1, 32, 128>}, {transform_indices = @transform_2, window_bounds = array<i64: 1, 1, 8, 128>}, {transform_indices = @transform_3, window_bounds = array<i64: 1, 1, 8, 128>}]} {
    %c0 = arith.constant 0 : index
    %c0_0 = arith.constant 0 : index
    %c0_1 = arith.constant 0 : index
    %c0_2 = arith.constant 0 : index
    %0 = vector.load %arg3[%c0, %c0_0, %c0_1, %c0_2] : memref<1x4x32x128xf32, #tpu.memory_space<vmem>>, vector<1x4x32x128xf32>
    %1 = vector.shape_cast %0 : vector<1x4x32x128xf32> to vector<4x32x128xf32>
    %cst = arith.constant dense<0xFF800000> : vector<32x128xf32>
    %2 = vector.multi_reduction <maximumf>, %1, %cst [0] : vector<4x32x128xf32> to vector<32x128xf32>
    %3 = vector.shape_cast %2 : vector<32x128xf32> to vector<1x32x128xf32>
    %4 = vector.broadcast %3 : vector<1x32x128xf32> to vector<4x32x128xf32>
    %5 = arith.subf %1, %4 : vector<4x32x128xf32>
    %6 = math.exp %5 : vector<4x32x128xf32>
    %cst_3 = arith.constant dense<0.000000e+00> : vector<32x128xf32>
    %7 = vector.multi_reduction <add>, %6, %cst_3 [0] : vector<4x32x128xf32> to vector<32x128xf32>
    %8 = arith.mulf %6, %5 : vector<4x32x128xf32>
    %cst_4 = arith.constant dense<0.000000e+00> : vector<32x128xf32>
    %9 = vector.multi_reduction <add>, %8, %cst_4 [0] : vector<4x32x128xf32> to vector<32x128xf32>
    %10 = math.log %7 : vector<32x128xf32>
    %11 = arith.divf %9, %7 : vector<32x128xf32>
    %12 = arith.subf %10, %11 : vector<32x128xf32>
    %c0_5 = arith.constant 0 : index
    %c0_6 = arith.constant 0 : index
    %c0_7 = arith.constant 0 : index
    %13 = vector.load %arg4[%c0_5, %c0_6, %c0_7] : memref<1x32x128xi8, #tpu.memory_space<vmem>>, vector<1x32x128xi8>
    %14 = vector.shape_cast %13 : vector<1x32x128xi8> to vector<32x128xi8>
    %15 = arith.extui %14 : vector<32x128xi8> to vector<32x128xi32>
    %c0_8 = arith.constant 0 : index
    %16 = memref.load %arg2[%c0_8] : memref<1xi32, #tpu.memory_space<smem>>
    %17 = vector.broadcast %16 : i32 to vector<32x128xi32>
    %18 = arith.cmpi ne, %15, %17 : vector<32x128xi32>
    %c255_i32 = arith.constant 255 : i32
    %19 = vector.broadcast %c255_i32 : i32 to vector<32x128xi32>
    %20 = arith.cmpi ne, %15, %19 : vector<32x128xi32>
    %21 = arith.andi %18, %20 : vector<32x128xi1>
    %22 = arith.extui %21 : vector<32x128xi1> to vector<32x128xi32>
    %23 = arith.sitofp %22 : vector<32x128xi32> to vector<32x128xf32>
    %24 = arith.mulf %12, %23 : vector<32x128xf32>
    %25 = vector.shape_cast %24 : vector<32x128xf32> to vector<4x8x128xf32>
    %cst_9 = arith.constant dense<0.000000e+00> : vector<8x128xf32>
    %26 = vector.multi_reduction <add>, %25, %cst_9 [0] : vector<4x8x128xf32> to vector<8x128xf32>
    %c0_10 = arith.constant 0 : index
    %c0_11 = arith.constant 0 : index
    %c0_12 = arith.constant 0 : index
    %c0_13 = arith.constant 0 : index
    %27 = vector.load %arg5[%c0_10, %c0_11, %c0_12, %c0_13] : memref<1x1x8x128xf32, #tpu.memory_space<vmem>>, vector<1x1x8x128xf32>
    %28 = vector.shape_cast %27 : vector<1x1x8x128xf32> to vector<8x128xf32>
    %29 = vector.shape_cast %26 : vector<8x128xf32> to vector<1x1x8x128xf32>
    tpu.vector_store %arg5[%c0_10, %c0_11, %c0_12, %c0_13], %29 {strides = array<i32>} : memref<1x1x8x128xf32, #tpu.memory_space<vmem>>, vector<1x1x8x128xf32>,
    %30 = vector.shape_cast %23 : vector<32x128xf32> to vector<4x8x128xf32>
    %cst_14 = arith.constant dense<0.000000e+00> : vector<8x128xf32>
    %31 = vector.multi_reduction <add>, %30, %cst_14 [0] : vector<4x8x128xf32> to vector<8x128xf32>
    %c0_15 = arith.constant 0 : index
    %c0_16 = arith.constant 0 : index
    %c0_17 = arith.constant 0 : index
    %c0_18 = arith.constant 0 : index
    %32 = vector.load %arg6[%c0_15, %c0_16, %c0_17, %c0_18] : memref<1x1x8x128xf32, #tpu.memory_space<vmem>>, vector<1x1x8x128xf32>
    %33 = vector.shape_cast %32 : vector<1x1x8x128xf32> to vector<8x128xf32>
    %34 = vector.shape_cast %31 : vector<8x128xf32> to vector<1x1x8x128xf32>
    tpu.vector_store %arg6[%c0_15, %c0_16, %c0_17, %c0_18], %34 {strides = array<i32>} : memref<1x1x8x128xf32, #tpu.memory_space<vmem>>, vector<1x1x8x128xf32>,
    return
  }
  func.func @transform_0(%arg0: i32, %arg1: i32, %arg2: memref<1xi32, #tpu.memory_space<smem>>) -> (i32, i32, i32, i32) {
    %c0_i32 = arith.constant 0 : i32
    %c0_i32_0 = arith.constant 0 : i32
    %c0_i32_1 = arith.constant 0 : i32
    return %arg0, %c0_i32, %arg1, %c0_i32_0 : i32, i32, i32, i32
  }
  func.func @transform_1(%arg0: i32, %arg1: i32, %arg2: memref<1xi32, #tpu.memory_space<smem>>) -> (i32, i32, i32) {
    %c0_i32 = arith.constant 0 : i32
    %c0_i32_0 = arith.constant 0 : i32
    return %arg0, %arg1, %c0_i32 : i32, i32, i32
  }
  func.func @transform_2(%arg0: i32, %arg1: i32, %arg2: memref<1xi32, #tpu.memory_space<smem>>) -> (i32, i32, i32, i32) {
    %c0_i32 = arith.constant 0 : i32
    %c0_i32_0 = arith.constant 0 : i32
    %c0_i32_1 = arith.constant 0 : i32
    return %arg0, %arg1, %c0_i32, %c0_i32_0 : i32, i32, i32, i32
  }
  func.func @transform_3(%arg0: i32, %arg1: i32, %arg2: memref<1xi32, #tpu.memory_space<smem>>) -> (i32, i32, i32, i32) {
    %c0_i32 = arith.constant 0 : i32
    %c0_i32_0 = arith.constant 0 : i32
    %c0_i32_1 = arith.constant 0 : i32
    return %arg0, %arg1, %c0_i32, %c0_i32_0 : i32, i32, i32, i32
  }
}

</mosaic_0001>

<llo_original>
// kernel: entropy_loss.1
$region0: #{entropy_loss.1}
  #allocation0 [shape = 'u32[]', space=smem, size = 0x4, offset = 0x4, fixed_abs, tag = 'smem constant byte address 0x4 - core index']
  #allocation1 [shape = 'u32[144,128]{1,0:T(1,128)}', space=vmem, size = 0x12000, scoped, tag = 'internal scratch']
  #allocation2 [shape = 's32[1]{0}', space=sflag, size = 0x4, scoped, tag = 'scoped memory for entropy_loss.1']
  #allocation3 [shape = 's32[1]{0:T(128)S(6)}', space=smem, size = 0x200, scoped, tag = 'prefetched SMEM operand 0']
  %s0 = inlined_call_operand.<no memory space> [shape: s32[1], index: 0, kind: input, shape index: {}]
  %s1 = inlined_call_operand.vmem [shape: f32[2,4,32,128], index: 1, kind: input, shape index: {}]
  %s2 = inlined_call_operand.vmem [shape: u8[2,32,128], index: 2, kind: input, shape index: {}]
  %s3 = inlined_call_operand.vmem [shape: f32[2,1,8,128], index: 3, kind: output, shape index: {0}]
  %s4 = inlined_call_operand.vmem [shape: f32[2,1,8,128], index: 4, kind: output, shape index: {1}]
  %5 = xla_tuple %s3, %s4
  %s6 = sld [smem:[#allocation0]]
  $region49: #{entropy_loss.1} parent=0
    _
  %s8 = ssub.s32 1, %s6
  %s9 = scalar_select 0, %s8, %s6
  %10 = sst [smem:[#allocation3]] %s0
  loop: start=0, step=1, limit=4
  $region2: #{entropy_loss.1} parent=0 // loop_pre_header
    _
  $region3: #{entropy_loss.1} parent=0 // loop_header
    %s12 = sphi 0, %s16
    %p13 = scmp.ge.s32.totalorder %s12, 4
    %s19 = sphi 0, %s31
    %s20 = sphi 0, %s27
    %s21 = sphi 0, %s19
    %s22 = sphi 0, %s20
    %s23 = sphi 0, %s21
    %s24 = sphi 0, %s22
    %s36 = sphi 0, %s38
    %s39 = sphi 0, %s36
    %s40 = sphi 0, %s39
    %s56 = sphi 0, %s40
    %s64 = sphi 0, %s66
    %s67 = sphi 0, %s64
    %s68 = sphi 0, %s67
    %s84 = sphi 0, %s68
    %s92 = sphi 0, %s94
    %s95 = sphi 0, %s92
    %s96 = sphi 0, %s95
    %s112 = sphi 0, %s96
    %s120 = sphi 0, %s122
    %s123 = sphi 0, %s120
    %s124 = sphi 0, %s123
    %s140 = sphi 0, %s124
  $region4: #{entropy_loss.1} parent=0 // loop_header_branch
    %15 = sbr.rel (%p13) target = $region8
  $region5: #{entropy_loss.1} parent=0 // loop_body
    %s17 = ssub.s32 %s12, 1
    %s18 = ssub.s32 %s12, 2
    %s25 = sadd.s32 1, %s20
    %p26 = scmp.ge.s32.totalorder %s25, 1
    %s27 = scalar_select %p26, 0, %s25
    %s28 = sadd.s32 1, %s19
    %s29 = scalar_select %p26, %s28, %s19
    %p30 = scmp.ge.s32.totalorder %s29, 2
    %s31 = scalar_select %p30, 0, %s29
    %s32 = ssub.s32 %s19, %s31
    %s33 = ssub.s32 %s20, %s27
    %s34 = sor.u32 %s32, %s33
    %p35 = scmp.eq.s32.totalorder %s34, 0
    %s37 = sadd.s32 %s36, 1
    %s38 = scalar_select %p35, %s36, %s37
    %p41 = pneg %p35
    %p42 = scmp.eq.s32.totalorder %s12, 1
    %p43 = por %p41, %p42
    %p44 = scmp.ne.s32.totalorder %s36, %s39
    %p45 = scmp.eq.s32.totalorder %s12, 0
    %p46 = por %p44, %p45
    %p47 = scmp.ne.s32.totalorder %s36, %s39
    %p48 = scmp.eq.s32.totalorder %s17, 1
    %p49 = por %p47, %p48
    %p50 = scmp.ne.s32.totalorder %s39, %s40
    %p51 = scmp.eq.s32.totalorder %s17, 0
    %p52 = por %p50, %p51
    %p53 = scmp.ne.s32.totalorder %s39, %s40
    %p54 = scmp.eq.s32.totalorder %s18, 1
    %p55 = por %p53, %p54
    %p57 = scmp.ne.s32.totalorder %s40, %s56
    %p58 = scmp.eq.s32.totalorder %s18, 0
    %p59 = por %p57, %p58
    %s60 = ssub.s32 %s19, %s31
    %s61 = ssub.s32 %s20, %s27
    %s62 = sor.u32 %s60, %s61
    %p63 = scmp.eq.s32.totalorder %s62, 0
    %s65 = sadd.s32 %s64, 1
    %s66 = scalar_select %p63, %s64, %s65
    %p69 = pneg %p63
    %p70 = scmp.eq.s32.totalorder %s12, 1
    %p71 = por %p69, %p70
    %p72 = scmp.ne.s32.totalorder %s64, %s67
    %p73 = scmp.eq.s32.totalorder %s12, 0
    %p74 = por %p72, %p73
    %p75 = scmp.ne.s32.totalorder %s64, %s67
    %p76 = scmp.eq.s32.totalorder %s17, 1
    %p77 = por %p75, %p76
    %p78 = scmp.ne.s32.totalorder %s67, %s68
    %p79 = scmp.eq.s32.totalorder %s17, 0
    %p80 = por %p78, %p79
    %p81 = scmp.ne.s32.totalorder %s67, %s68
    %p82 = scmp.eq.s32.totalorder %s18, 1
    %p83 = por %p81, %p82
    %p85 = scmp.ne.s32.totalorder %s68, %s84
    %p86 = scmp.eq.s32.totalorder %s18, 0
    %p87 = por %p85, %p86
    %s88 = ssub.s32 %s19, %s31
    %s89 = ssub.s32 %s20, %s27
    %s90 = sor.u32 %s88, %s89
    %p91 = scmp.eq.s32.totalorder %s90, 0
    %s93 = sadd.s32 %s92, 1
    %s94 = scalar_select %p91, %s92, %s93
    %p97 = pneg %p91
    %p98 = scmp.eq.s32.totalorder %s12, 1
    %p99 = por %p97, %p98
    %p100 = scmp.ne.s32.totalorder %s92, %s95
    %p101 = scmp.eq.s32.totalorder %s12, 0
    %p102 = por %p100, %p101
    %p103 = scmp.ne.s32.totalorder %s92, %s95
    %p104 = scmp.eq.s32.totalorder %s17, 1
    %p105 = por %p103, %p104
    %p106 = scmp.ne.s32.totalorder %s95, %s96
    %p107 = scmp.eq.s32.totalorder %s17, 0
    %p108 = por %p106, %p107
    %p109 = scmp.ne.s32.totalorder %s95, %s96
    %p110 = scmp.eq.s32.totalorder %s18, 1
    %p111 = por %p109, %p110
    %p113 = scmp.ne.s32.totalorder %s96, %s112
    %p114 = scmp.eq.s32.totalorder %s18, 0
    %p115 = por %p113, %p114
    %s116 = ssub.s32 %s19, %s31
    %s117 = ssub.s32 %s20, %s27
    %s118 = sor.u32 %s116, %s117
    %p119 = scmp.eq.s32.totalorder %s118, 0
    %s121 = sadd.s32 %s120, 1
    %s122 = scalar_select %p119, %s120, %s121
    %p125 = pneg %p119
    %p126 = scmp.eq.s32.totalorder %s12, 1
    %p127 = por %p125, %p126
    %p128 = scmp.ne.s32.totalorder %s120, %s123
    %p129 = scmp.eq.s32.totalorder %s12, 0
    %p130 = por %p128, %p129
    %p131 = scmp.ne.s32.totalorder %s120, %s123
    %p132 = scmp.eq.s32.totalorder %s17, 1
    %p133 = por %p131, %p132
    %p134 = scmp.ne.s32.totalorder %s123, %s124
    %p135 = scmp.eq.s32.totalorder %s17, 0
    %p136 = por %p134, %p135
    %p137 = scmp.ne.s32.totalorder %s123, %s124
    %p138 = scmp.eq.s32.totalorder %s18, 1
    %p139 = por %p137, %p138
    %p141 = scmp.ne.s32.totalorder %s124, %s140
    %p142 = scmp.eq.s32.totalorder %s18, 0
    %p143 = por %p141, %p142
    %p144 = scmp.le.s32.totalorder 1, %s12
    %p145 = scmp.lt.s32.totalorder %s12, 3
    %p146 = pnand %p144, %p145
    %p147 = pneg %p146
    // Predicated region
    $region9: #{entropy_loss.1} parent=5 // pred_check
      _
    $region10: #{entropy_loss.1} parent=5 // pred_check_branch
      %149 = sbr.rel (%p146) target = $region12
    $region11: #{entropy_loss.1} parent=5 // pred_region
      %s150 = ssub.s32 %s12, 1
    $region12: #{entropy_loss.1} parent=5 // pred_fallthru
      _
    %p151 = scmp.lt.s32.totalorder %s12, 2
    // Predicated region
    $region13: #{entropy_loss.1} parent=5 // pred_check
      %p152 = pneg %p151
    $region14: #{entropy_loss.1} parent=5 // pred_check_branch
      %154 = sbr.rel (%p152) target = $region16
    $region15: #{entropy_loss.1} parent=5 // pred_region
      // Predicated region
      $region17: #{entropy_loss.1} parent=15 // pred_check
        %p155 = pneg %p46
      $region18: #{entropy_loss.1} parent=15 // pred_check_branch
        %157 = sbr.rel (%p155) target = $region20
      $region19: #{entropy_loss.1} parent=15 // pred_region
        %s158 = smul.u32 4, %s20
        %p159 = scmp.lt.s32.totalorder %s19, 1
        %s160 = scalar_select %p159, %s19, 1
        %p161 = scmp.lt.s32.totalorder %s158, 3
        %s162 = scalar_select %p161, %s158, 3
        %s163 = smul.addr %s160, 16
        %s164 = sadd.s32 %s162, %s163
        %s165 = smul.addr %s164, 8
        %s166 = scalar_lea.vmem %s1, %s165
        %s167 = smul.u32 4, %s20
      $region20: #{entropy_loss.1} parent=15 // pred_fallthru
        _
      // Predicated region
      $region21: #{entropy_loss.1} parent=15 // pred_check
        %p168 = pneg %p74
      $region22: #{entropy_loss.1} parent=15 // pred_check_branch
        %170 = sbr.rel (%p168) target = $region24
      $region23: #{entropy_loss.1} parent=15 // pred_region
        %p171 = scmp.lt.s32.totalorder %s19, 1
        %s172 = scalar_select %p171, %s19, 1
        %p173 = scmp.lt.s32.totalorder %s20, 0
        %s174 = scalar_select %p173, %s20, 0
        %s175 = sadd.s32 %s174, %s172
        %s176 = smul.addr %s175, 8
        %s177 = scalar_lea.vmem %s2, %s176
      $region24: #{entropy_loss.1} parent=15 // pred_fallthru
        _
    $region16: #{entropy_loss.1} parent=5 // pred_fallthru
      _
    %p178 = scmp.le.s32.totalorder 1, %s12
    %p179 = scmp.lt.s32.totalorder %s12, 3
    %p180 = pnand %p178, %p179
    %p181 = pneg %p180
    // Predicated region
    $region25: #{entropy_loss.1} parent=5 // pred_check
      _
    $region26: #{entropy_loss.1} parent=5 // pred_check_branch
      %183 = sbr.rel (%p180) target = $region28
    $region27: #{entropy_loss.1} parent=5 // pred_region
      %s184 = ssub.s32 %s12, 1
      %s185 = smul.u32 4, %s22
      %p186 = scmp.lt.s32.totalorder %s21, 1
      %s187 = scalar_select %p186, %s21, 1
      %p188 = scmp.lt.s32.totalorder %s185, 3
      %s189 = scalar_select %p188, %s185, 3
      %s190 = smul.addr %s187, 16
      %s191 = sadd.s32 %s189, %s190
      %s192 = smul.addr %s191, 8
      %s193 = scalar_lea.vmem %s1, %s192
      %p194 = pneg %p52
      %p195 = pneg %p49
      %p196 = scmp.lt.s32.totalorder %s21, 1
      %s197 = scalar_select %p196, %s21, 1
      %p198 = scmp.lt.s32.totalorder %s22, 0
      %s199 = scalar_select %p198, %s22, 0
      %s200 = sadd.s32 %s199, %s197
      %s201 = smul.addr %s200, 8
      %s202 = scalar_lea.vmem %s2, %s201
      %p203 = pneg %p80
      %p204 = pneg %p77
      %p205 = pneg %p108
      %p206 = pneg %p105
      %p207 = scmp.lt.s32.totalorder %s21, 1
      %s208 = scalar_select %p207, %s21, 1
      %p209 = scmp.lt.s32.totalorder %s22, 0
      %s210 = scalar_select %p209, %s22, 0
      %s211 = sadd.s32 %s210, %s208
      %s212 = smul.addr %s211, 8
      %s213 = scalar_lea.vmem %s3, %s212
      %p214 = pneg %p136
      %p215 = pneg %p133
      %p216 = scmp.lt.s32.totalorder %s21, 1
      %s217 = scalar_select %p216, %s21, 1
      %p218 = scmp.lt.s32.totalorder %s22, 0
      %s219 = scalar_select %p218, %s22, 0
      %s220 = sadd.s32 %s219, %s217
      %s221 = smul.addr %s220, 8
      %s222 = scalar_lea.vmem %s4, %s221
      %s223 = smul.u32 4, %s22
      %p224 = scmp.lt.s32.totalorder %s21, 1
      %s225 = scalar_select %p224, %s21, 1
      %p226 = scmp.lt.s32.totalorder %s223, 3
      %s227 = scalar_select %p226, %s223, 3
      %s228 = smul.addr %s225, 16
      %s229 = sadd.s32 %s227, %s228
      %s230 = smul.addr %s229, 8
      %s231 = scalar_lea.vmem %s1, %s230
      %s232 = smul.u32 4, %s22
      %p233 = scmp.lt.s32.totalorder %s21, 1
      %s234 = scalar_select %p233, %s21, 1
      %p235 = scmp.lt.s32.totalorder %s22, 0
      %s236 = scalar_select %p235, %s22, 0
      %s237 = sadd.s32 %s236, %s234
      %s238 = smul.addr %s237, 8
      %s239 = scalar_lea.vmem %s2, %s238
      %p240 = scmp.lt.s32.totalorder %s21, 1
      %s241 = scalar_select %p240, %s21, 1
      %p242 = scmp.lt.s32.totalorder %s22, 0
      %s243 = scalar_select %p242, %s22, 0
      %s244 = sadd.s32 %s243, %s241
      %s245 = smul.addr %s244, 8
      %s246 = scalar_lea.vmem %s3, %s245
      %p247 = scmp.lt.s32.totalorder %s21, 1
      %s248 = scalar_select %p247, %s21, 1
      %p249 = scmp.lt.s32.totalorder %s22, 0
      %s250 = scalar_select %p249, %s22, 0
      %s251 = sadd.s32 %s250, %s248
      %s252 = smul.addr %s251, 8
      %s253 = scalar_lea.vmem %s4, %s252
      %v254 = vld [vmem:[%s231] sm:$0xff]
      %v255 = vld [vmem:[%s231 + $0x8] sm:$0xff]
      %v256 = vld [vmem:[%s231 + $0x10] sm:$0xff]
      %v257 = vld [vmem:[%s231 + $0x18] sm:$0xff]
      %v258 = vld [vmem:[%s231 + $0x20] sm:$0xff]
      %v259 = vld [vmem:[%s231 + $0x28] sm:$0xff]
      %v260 = vld [vmem:[%s231 + $0x30] sm:$0xff]
      %v261 = vld [vmem:[%s231 + $0x38] sm:$0xff]
      %v262 = vld [vmem:[%s231 + $0x40] sm:$0xff]
      %v263 = vld [vmem:[%s231 + $0x48] sm:$0xff]
      %v264 = vld [vmem:[%s231 + $0x50] sm:$0xff]
      %v265 = vld [vmem:[%s231 + $0x58] sm:$0xff]
      %v266 = vld [vmem:[%s231 + $0x60] sm:$0xff]
      %v267 = vld [vmem:[%s231 + $0x68] sm:$0xff]
      %v268 = vld [vmem:[%s231 + $0x70] sm:$0xff]
      %v269 = vld [vmem:[%s231 + $0x78] sm:$0xff]
      %v270 = vmax.f32 %v254, %v258
      %v271 = vmax.f32 %v270, %v262
      %v272 = vmax.f32 %v271, %v266
      %v273 = vmax.f32 %v255, %v259
      %v274 = vmax.f32 %v273, %v263
      %v275 = vmax.f32 %v274, %v267
      %v276 = vmax.f32 %v256, %v260
      %v277 = vmax.f32 %v276, %v264
      %v278 = vmax.f32 %v277, %v268
      %v279 = vmax.f32 %v257, %v261
      %v280 = vmax.f32 %v279, %v265
      %v281 = vmax.f32 %v280, %v269
      %v282 = vsub.f32 %v254, %v272
      %v283 = vsub.f32 %v255, %v275
      %v284 = vsub.f32 %v256, %v278
      %v285 = vsub.f32 %v257, %v281
      %v286 = vsub.f32 %v258, %v272
      %v287 = vsub.f32 %v259, %v275
      %v288 = vsub.f32 %v260, %v278
      %v289 = vsub.f32 %v261, %v281
      %v290 = vsub.f32 %v262, %v272
      %v291 = vsub.f32 %v263, %v275
      %v292 = vsub.f32 %v264, %v278
      %v293 = vsub.f32 %v265, %v281
      %v294 = vsub.f32 %v266, %v272
      %v295 = vsub.f32 %v267, %v275
      %v296 = vsub.f32 %v268, %v278
      %v297 = vsub.f32 %v269, %v281
      %v298 = vmul.f32 %v282, 1.442695
      %v299 = vpow.pop %v298
      %v300 = vmul.f32 %v283, 1.442695
      %v301 = vpow.pop %v300
      %v302 = vmul.f32 %v284, 1.442695
      %v303 = vpow.pop %v302
      %v304 = vmul.f32 %v285, 1.442695
      %v305 = vpow.pop %v304
      %v306 = vmul.f32 %v286, 1.442695
      %v307 = vpow.pop %v306
      %v308 = vmul.f32 %v287, 1.442695
      %v309 = vpow.pop %v308
      %v310 = vmul.f32 %v288, 1.442695
      %v311 = vpow.pop %v310
      %v312 = vmul.f32 %v289, 1.442695
      %v313 = vpow.pop %v312
      %v314 = vmul.f32 %v290, 1.442695
      %v315 = vpow.pop %v314
      %v316 = vmul.f32 %v291, 1.442695
      %v317 = vpow.pop %v316
      %v318 = vmul.f32 %v292, 1.442695
      %v319 = vpow.pop %v318
      %v320 = vmul.f32 %v293, 1.442695
      %v321 = vpow.pop %v320
      %v322 = vmul.f32 %v294, 1.442695
      %v323 = vpow.pop %v322
      %v324 = vmul.f32 %v295, 1.442695
      %v325 = vpow.pop %v324
      %v326 = vmul.f32 %v296, 1.442695
      %v327 = vpow.pop %v326
      %v328 = vmul.f32 %v297, 1.442695
      %v329 = vpow.pop %v328
      %v330 = vadd.f32 %v299, %v307
      %v331 = vadd.f32 %v330, %v315
      %v332 = vadd.f32 %v331, %v323
      %v333 = vadd.f32 %v301, %v309
      %v334 = vadd.f32 %v333, %v317
      %v335 = vadd.f32 %v334, %v325
      %v336 = vadd.f32 %v303, %v311
      %v337 = vadd.f32 %v336, %v319
      %v338 = vadd.f32 %v337, %v327
      %v339 = vadd.f32 %v305, %v313
      %v340 = vadd.f32 %v339, %v321
      %v341 = vadd.f32 %v340, %v329
      %v342 = vmul.f32 %v299, %v282
      %v343 = vmul.f32 %v301, %v283
      %v344 = vmul.f32 %v303, %v284
      %v345 = vmul.f32 %v305, %v285
      %v346 = vmul.f32 %v307, %v286
      %v347 = vmul.f32 %v309, %v287
      %v348 = vmul.f32 %v311, %v288
      %v349 = vmul.f32 %v313, %v289
      %v350 = vmul.f32 %v315, %v290
      %v351 = vmul.f32 %v317, %v291
      %v352 = vmul.f32 %v319, %v292
      %v353 = vmul.f32 %v321, %v293
      %v354 = vmul.f32 %v323, %v294
      %v355 = vmul.f32 %v325, %v295
      %v356 = vmul.f32 %v327, %v296
      %v357 = vmul.f32 %v329, %v297
      %v358 = vadd.f32 %v342, %v346
      %v359 = vadd.f32 %v358, %v350
      %v360 = vadd.f32 %v359, %v354
      %v361 = vadd.f32 %v343, %v347
      %v362 = vadd.f32 %v361, %v351
      %v363 = vadd.f32 %v362, %v355
      %v364 = vadd.f32 %v344, %v348
      %v365 = vadd.f32 %v364, %v352
      %v366 = vadd.f32 %v365, %v356
      %v367 = vadd.f32 %v345, %v349
      %v368 = vadd.f32 %v367, %v353
      %v369 = vadd.f32 %v368, %v357
      %v370 = vlog2.pop %v332
      %v371 = vmul.f32 %v370, 0.6931472
      %v372 = vlog2.pop %v335
      %v373 = vmul.f32 %v372, 0.6931472
      %v374 = vlog2.pop %v338
      %v375 = vmul.f32 %v374, 0.6931472
      %v376 = vlog2.pop %v341
      %v377 = vmul.f32 %v376, 0.6931472
      %v378 = vrcp.pop %v332
      %v379 = vmul.f32 %v360, %v378
      %v380 = vrcp.pop %v335
      %v381 = vmul.f32 %v363, %v380
      %v382 = vrcp.pop %v338
      %v383 = vmul.f32 %v366, %v382
      %v384 = vrcp.pop %v341
      %v385 = vmul.f32 %v369, %v384
      %v386 = vsub.f32 %v371, %v379
      %v387 = vsub.f32 %v373, %v381
      %v388 = vsub.f32 %v375, %v383
      %v389 = vsub.f32 %v377, %v385
      %v390 = vld [vmem:[%s239] sm:$0xff]
      %v391 = vunpack.c.0.s8 %v390
      %v392 = vunpack.c.1.s8 %v390
      %v393 = vunpack.c.2.s8 %v390
      %v394 = vunpack.c.3.s8 %v390
      %v395 = vand.u32 %v391, 255
      %v396 = vand.u32 %v392, 255
      %v397 = vand.u32 %v393, 255
      %v398 = vand.u32 %v394, 255
      %s399 = sld [smem:[#allocation3]]
      %v400 = vstv %s399
      %vm401 = vcmp.ne.s32.totalorder %v395, %v400
      %vm402 = vcmp.ne.s32.totalorder %v396, %v400
      %vm403 = vcmp.ne.s32.totalorder %v397, %v400
      %vm404 = vcmp.ne.s32.totalorder %v398, %v400
      %vm405 = vcmp.ne.s32.totalorder %v395, 255
      %vm406 = vcmp.ne.s32.totalorder %v396, 255
      %vm407 = vcmp.ne.s32.totalorder %v397, 255
      %vm408 = vcmp.ne.s32.totalorder %v398, 255
      %vm409 = vmand %vm401, %vm405
      %vm410 = vmand %vm402, %vm406
      %vm411 = vmand %vm403, %vm407
      %vm412 = vmand %vm404, %vm408
      %v413 = vsel %vm409, 1, 0
      %v414 = vsel %vm410, 1, 0
      %v415 = vsel %vm411, 1, 0
      %v416 = vsel %vm412, 1, 0
      %v417 = vcvt.s32.f32 %v413
      %v418 = vcvt.s32.f32 %v414
      %v419 = vcvt.s32.f32 %v415
      %v420 = vcvt.s32.f32 %v416
      %v421 = vmul.f32 %v386, %v417
      %v422 = vmul.f32 %v387, %v418
      %v423 = vmul.f32 %v388, %v419
      %v424 = vmul.f32 %v389, %v420
      %v425 = vadd.f32 %v421, %v422
      %v426 = vadd.f32 %v425, %v423
      %v427 = vadd.f32 %v426, %v424
      %428 = vst [vmem:[%s246] sm:$0xff] %v427
      %v429 = vadd.f32 %v417, %v418
      %v430 = vadd.f32 %v429, %v419
      %v431 = vadd.f32 %v430, %v420
      %432 = vst [vmem:[%s253] sm:$0xff] %v431
      %p433 = scmp.lt.s32.totalorder %s21, 1
      %s434 = scalar_select %p433, %s21, 1
      %p435 = scmp.lt.s32.totalorder %s22, 0
      %s436 = scalar_select %p435, %s22, 0
      %s437 = sadd.s32 %s436, %s434
      %s438 = smul.addr %s437, 8
      %s439 = scalar_lea.vmem %s3, %s438
      %p440 = scmp.lt.s32.totalorder %s21, 1
      %s441 = scalar_select %p440, %s21, 1
      %p442 = scmp.lt.s32.totalorder %s22, 0
      %s443 = scalar_select %p442, %s22, 0
      %s444 = sadd.s32 %s443, %s441
      %s445 = smul.addr %s444, 8
      %s446 = scalar_lea.vmem %s4, %s445
      // Predicated region
      $region29: #{entropy_loss.1} parent=27 // pred_check
        %p447 = pneg %p105
      $region30: #{entropy_loss.1} parent=27 // pred_check_branch
        %449 = sbr.rel (%p447) target = $region32
      $region31: #{entropy_loss.1} parent=27 // pred_region
        _
      $region32: #{entropy_loss.1} parent=27 // pred_fallthru
        _
      // Predicated region
      $region33: #{entropy_loss.1} parent=27 // pred_check
        %p450 = pneg %p133
      $region34: #{entropy_loss.1} parent=27 // pred_check_branch
        %452 = sbr.rel (%p450) target = $region36
      $region35: #{entropy_loss.1} parent=27 // pred_region
        _
      $region36: #{entropy_loss.1} parent=27 // pred_fallthru
        _
    $region28: #{entropy_loss.1} parent=5 // pred_fallthru
      _
    %p453 = scmp.le.s32.totalorder 2, %s12
    // Predicated region
    $region37: #{entropy_loss.1} parent=5 // pred_check
      %p454 = pneg %p453
    $region38: #{entropy_loss.1} parent=5 // pred_check_branch
      %456 = sbr.rel (%p454) target = $region40
    $region39: #{entropy_loss.1} parent=5 // pred_region
      %s457 = ssub.s32 %s12, 2
      // Predicated region
      $region41: #{entropy_loss.1} parent=39 // pred_check
        %p458 = pneg %p111
      $region42: #{entropy_loss.1} parent=39 // pred_check_branch
        %460 = sbr.rel (%p458) target = $region44
      $region43: #{entropy_loss.1} parent=39 // pred_region
        %p461 = scmp.lt.s32.totalorder %s23, 1
        %s462 = scalar_select %p461, %s23, 1
        %p463 = scmp.lt.s32.totalorder %s24, 0
        %s464 = scalar_select %p463, %s24, 0
        %s465 = sadd.s32 %s464, %s462
        %s466 = smul.addr %s465, 8
        %s467 = scalar_lea.vmem %s3, %s466
      $region44: #{entropy_loss.1} parent=39 // pred_fallthru
        _
      // Predicated region
      $region45: #{entropy_loss.1} parent=39 // pred_check
        %p468 = pneg %p139
      $region46: #{entropy_loss.1} parent=39 // pred_check_branch
        %470 = sbr.rel (%p468) target = $region48
      $region47: #{entropy_loss.1} parent=39 // pred_region
        %p471 = scmp.lt.s32.totalorder %s23, 1
        %s472 = scalar_select %p471, %s23, 1
        %p473 = scmp.lt.s32.totalorder %s24, 0
        %s474 = scalar_select %p473, %s24, 0
        %s475 = sadd.s32 %s474, %s472
        %s476 = smul.addr %s475, 8
        %s477 = scalar_lea.vmem %s4, %s476
      $region48: #{entropy_loss.1} parent=39 // pred_fallthru
        _
    $region40: #{entropy_loss.1} parent=5 // pred_fallthru
      _
  $region6: #{entropy_loss.1} parent=0 // loop_footer
    %s16 = sadd.s32 1, %s12
  $region7: #{entropy_loss.1} parent=0 // loop_footer_branch
    %11 = sbr.rel target = $region3
  $region8: #{entropy_loss.1} parent=0 // loop_exit
    _

</llo_original>
